<compile_context>
chip_gen: v7x
topology: tpu7x:2x2x1
jax: 0.10.0
libtpu: 0.0.40
codegen_flags: <defaults>
</compile_context>

<pallas_src>
import functools

import jax
import jax.numpy as jnp
from jax.experimental import pallas as pl
from jax.experimental.pallas import tpu as pltpu

IGNORE_INDEX = -100


def _mask_recon_loss_kernel(logit_ref, label_ref, mask_ref, nll_ref, cnt_ref,
                            *, hw, tile_pixels, tiles_per_seg):
    """One grid step handles a (C, tile_pixels) tile of one (batch, segment).

    logit_ref : (1, C, T) native float — classes on sublanes, pixels on lanes
    label_ref : (1, 1, T) int
    mask_ref  : (1, 1, T) float (native dtype)
    nll_ref   : (1, 1, T) f32 — per-lane partial NLL sums   (resident over tiles)
    cnt_ref   : (1, 1, T) f32 — per-lane partial valid count (resident over tiles)
    """
    s = pl.program_id(1)
    t = pl.program_id(2)

    @pl.when(t == 0)
    def _():
        nll_ref[...] = jnp.zeros_like(nll_ref)
        cnt_ref[...] = jnp.zeros_like(cnt_ref)

    x = logit_ref[0]                                    # (C, T) native dtype
    lbl = label_ref[0]                                  # (1, T) int
    msk = mask_ref[0]                                   # (1, T) float

    # Numerically-stable logsumexp over the class (sublane) axis.  The max
    # stays in the input dtype; the subtract promotes to f32 (no separate
    # full-tile cast pass).
    m = jnp.max(x, axis=0, keepdims=True).astype(jnp.float32)   # (1, T)
    xm = x - m                                                  # (C, T) f32
    sum_e = jnp.sum(jnp.exp(xm), axis=0, keepdims=True)         # (1, T)

    # (logits[label] - max) selected with a broadcasting compare against a
    # (C, 1) iota — no materialized (C, T) int32 iota, reuses xm.
    class_iota = jax.lax.broadcasted_iota(jnp.int32, (x.shape[0], 1), 0)
    label_shift = jnp.sum(jnp.where(class_iota == lbl, xm, 0.0),
                          axis=0, keepdims=True)                # (1, T)

    # Valid iff mask >= 0.5, label not already IGNORE_INDEX, and the pixel lies
    # inside the (un-padded) image.  The bounds term also masks the ragged
    # last tile and any duplicated tile from the clamped segment index map.
    tile_idx = s * tiles_per_seg + t
    lane = jax.lax.broadcasted_iota(jnp.int32, (1, tile_pixels), 1)
    in_bounds = (tile_idx * tile_pixels + lane) < hw            # (1, T)
    valid = jnp.logical_and(jnp.logical_and(msk >= 0.5, lbl != IGNORE_INDEX),
                            in_bounds)                          # (1, T)

    # NOTE: labels outside [0, C) that are not IGNORE_INDEX contribute
    # logsumexp - max instead of raising like PyTorch does.
    nll = jnp.where(valid, jnp.log(sum_e) - label_shift, 0.0)   # (1, T) f32

    # Lane-dense elementwise accumulation; no per-step cross-lane reduce.
    nll_ref[...] += nll[None]
    cnt_ref[...] += valid.astype(jnp.float32)[None]


def _choose_tile_and_vmem(hw, c, logit_isz, label_isz, mask_isz, forced_tile=None):
    """Pick a lane-aligned pixel tile from a per-generation VMEM budget."""
    try:
        vmem_cap = int(pltpu.get_tpu_info().vmem_capacity_bytes)
    except Exception:
        vmem_cap = 64 * 1024 * 1024            # conservative: v7x per-TC VMEM

    # Scoped-VMEM request for this kernel (overrides the 16/32 MiB scoped
    # defaults, stays well under physical capacity on every generation).
    vmem_limit = max(16 * 1024 * 1024, min(int(vmem_cap * 0.6), 64 * 1024 * 1024))

    # Per-pixel VMEM footprint of one tile:
    #   2x double-buffered logits + labels + mask (native dtypes)
    #   ~3 full-tile f32 temporaries in the body (xm, exp(xm), masked select)
    #   2 lane-wide f32 accumulators (double-buffered outputs)
    # If C is not a multiple of 8 (f32) / 16 (bf16), sublane padding inflates
    # the real footprint somewhat; the 0.75 budget factor absorbs that.
    per_pixel = (2 * c * logit_isz
                 + 2 * (label_isz + mask_isz)
                 + 3 * c * 4
                 + 4 * 4)

    if forced_tile is not None:
        tile = int(forced_tile)
    elif hw <= 128:
        tile = hw                              # single block; last dim == array dim
    else:
        tile = (int(vmem_limit * 0.75)) // max(per_pixel, 1)
        tile = max(128, (min(tile, hw) // 128) * 128)

    vmem_limit = max(vmem_limit, per_pixel * tile + (2 << 20))
    vmem_limit = min(vmem_limit, int(vmem_cap * 0.9))
    return int(tile), int(vmem_limit)


def mask_recon_loss(pred_logit, gt_label, gt_mask, *, tile_pixels=None):
    """pred_logit: (N, C, H, W) float; gt_label: (N, H, W) int; gt_mask: (N, 1, H, W) float."""
    N, C, H, W = pred_logit.shape
    HW = H * W

    # Free reshapes only — no transpose, no pad, no dtype copies.  Logits
    # stream in NCHW order with pixels on lanes / classes on sublanes, in
    # their native dtype (bf16 stays bf16 on the wire).
    logits = pred_logit.reshape(N, C, HW)
    labels = gt_label.reshape(N, 1, HW)
    if labels.dtype not in (jnp.dtype(jnp.int32), jnp.dtype(jnp.int16)):
        labels = labels.astype(jnp.int32)
    mask = gt_mask.reshape(N, 1, HW)
    if not jnp.issubdtype(mask.dtype, jnp.floating):
        mask = mask.astype(jnp.float32)

    tile, vmem_limit = _choose_tile_and_vmem(
        HW, C,
        jnp.dtype(logits.dtype).itemsize,
        jnp.dtype(labels.dtype).itemsize,
        jnp.dtype(mask.dtype).itemsize,
        forced_tile=tile_pixels)

    num_tiles = pl.cdiv(HW, tile)
    # Give both TensorCores of a megacore (v7x) independent work even when
    # N == 1 by splitting the pixel axis into two "parallel" segments.
    num_segments = 2 if (N == 1 and num_tiles >= 2) else 1
    tiles_per_seg = pl.cdiv(num_tiles, num_segments)
    grid = (N, num_segments, tiles_per_seg)

    def data_idx(n, s, t):
        blk = s * tiles_per_seg + t
        if num_segments > 1:
            # Segments may over-cover the tile range; clamp the DMA to the
            # last real tile (the in-kernel bounds mask zeroes its output).
            blk = jnp.minimum(blk, num_tiles - 1)
        return (n, 0, blk)

    out_idx = lambda n, s, t: (n * num_segments + s, 0, 0)

    kernel = functools.partial(_mask_recon_loss_kernel,
                               hw=HW, tile_pixels=tile,
                               tiles_per_seg=tiles_per_seg)

    nll_part, cnt_part = pl.pallas_call(
        kernel,
        out_shape=(
            jax.ShapeDtypeStruct((N * num_segments, 1, tile), jnp.float32),
            jax.ShapeDtypeStruct((N * num_segments, 1, tile), jnp.float32),
        ),
        grid_spec=pltpu.PrefetchScalarGridSpec(
            num_scalar_prefetch=0,
            grid=grid,
            in_specs=[
                pl.BlockSpec((1, C, tile), data_idx),
                pl.BlockSpec((1, 1, tile), data_idx),
                pl.BlockSpec((1, 1, tile), data_idx),
            ],
            out_specs=[
                pl.BlockSpec((1, 1, tile), out_idx),
                pl.BlockSpec((1, 1, tile), out_idx),
            ],
        ),
        compiler_params=pltpu.CompilerParams(
            # batch & segment axes parallel (megacore), pixel axis = reduction.
            dimension_semantics=("parallel", "parallel", "arbitrary"),
            vmem_limit_bytes=vmem_limit,
        ),
    )(logits, labels, mask)

    # Final reduction + mean over valid pixels (nn.CrossEntropyLoss 'mean').
    nll_sum = jnp.sum(nll_part, dtype=jnp.float32)
    valid_cnt = jnp.sum(cnt_part, dtype=jnp.float32)
    # NOTE: zero valid pixels divides by zero (NaN), matching
    # nn.CrossEntropyLoss(ignore_index=...) behavior.
    return (nll_sum / valid_cnt).astype(jnp.float32)


def _reference_loss(pred_logit, gt_label, gt_mask):
    """Pure-JAX reference for a sanity check."""
    N, C, H, W = pred_logit.shape
    logits = jnp.transpose(pred_logit, (0, 2, 3, 1)).reshape(-1, C).astype(jnp.float32)
    labels = gt_label.reshape(-1).astype(jnp.int32)
    mask = gt_mask.reshape(-1).astype(jnp.float32)
    valid = jnp.logical_and(mask >= 0.5, labels != IGNORE_INDEX)
    logp = jax.nn.log_softmax(logits, axis=-1)
    safe_lbl = jnp.where(valid, labels, 0)
    nll = -jnp.take_along_axis(logp, safe_lbl[:, None], axis=-1)[:, 0]
    nll = jnp.where(valid, nll, 0.0)
    return jnp.sum(nll) / jnp.sum(valid.astype(jnp.float32))


if __name__ == "__main__":
    # Case 1: even tiling, N > 1 (batch-parallel path), f32.
    k1, k2, k3 = jax.random.split(jax.random.PRNGKey(0), 3)
    N, C, H, W = 2, 8, 16, 16
    pred = jax.random.normal(k1, (N, C, H, W), dtype=jnp.float32)
    lbl = jax.random.randint(k2, (N, H, W), 0, C, dtype=jnp.int32)
    msk = (jax.random.uniform(k3, (N, 1, H, W)) < 0.7).astype(jnp.float32)
    out = mask_recon_loss(pred, lbl, msk)
    jax.block_until_ready(out)
    ref = _reference_loss(pred, lbl, msk)
    assert jnp.allclose(out, ref, rtol=1e-5, atol=1e-5), (out, ref)

    # Case 2: N == 1, ragged pixel count (18*18 = 324), forced tile of 128 so
    # the last tile is partial and the 2-segment split has an odd tile count
    # (exercises the clamped block index); labels already contain IGNORE_INDEX.
    k4, k5, k6, k7 = jax.random.split(jax.random.PRNGKey(1), 4)
    N2, C2, H2, W2 = 1, 5, 18, 18
    pred2 = jax.random.normal(k4, (N2, C2, H2, W2), dtype=jnp.float32)
    lbl2 = jax.random.randint(k5, (N2, H2, W2), 0, C2, dtype=jnp.int32)
    lbl2 = jnp.where(jax.random.uniform(k7, lbl2.shape) < 0.1, IGNORE_INDEX, lbl2)
    msk2 = (jax.random.uniform(k6, (N2, 1, H2, W2)) < 0.6).astype(jnp.float32)
    out2 = mask_recon_loss(pred2, lbl2, msk2, tile_pixels=128)
    jax.block_until_ready(out2)
    ref2 = _reference_loss(pred2, lbl2, msk2)
    assert jnp.allclose(out2, ref2, rtol=1e-5, atol=1e-5), (out2, ref2)

    # Case 3: bf16 logits and bf16 mask streamed in their native dtype.
    k8, k9, k10 = jax.random.split(jax.random.PRNGKey(2), 3)
    pred3 = jax.random.normal(k8, (2, 8, 16, 16), dtype=jnp.bfloat16)
    lbl3 = jax.random.randint(k9, (2, 16, 16), 0, 8, dtype=jnp.int32)
    msk3 = (jax.random.uniform(k10, (2, 1, 16, 16)) < 0.7).astype(jnp.bfloat16)
    out3 = mask_recon_loss(pred3, lbl3, msk3)
    jax.block_until_ready(out3)
    ref3 = _reference_loss(pred3, lbl3, msk3)
    assert jnp.allclose(out3, ref3, rtol=1e-3, atol=1e-3), (out3, ref3)

    print("KERNEL_OK")
</pallas_src>

<mosaic_0001>
module attributes {stable_mosaic.version = 11 : i64} {
  func.func @_mask_recon_loss_kernel(%arg0: i32, %arg1: i32, %arg2: i32, %arg3: memref<1x8x256xf32, #tpu.memory_space<vmem>>, %arg4: memref<1x1x256xi32, #tpu.memory_space<vmem>>, %arg5: memref<1x1x256xf32, #tpu.memory_space<vmem>>, %arg6: memref<1x1x256xf32, #tpu.memory_space<vmem>>, %arg7: memref<1x1x256xf32, #tpu.memory_space<vmem>>) attributes {dimension_semantics = [#tpu.dimension_semantics<parallel>, #tpu.dimension_semantics<parallel>, #tpu.dimension_semantics<arbitrary>], iteration_bounds = array<i64: 2, 1, 1>, scalar_prefetch = 0 : i64, scratch_operands = 0 : i64, tpu.core_type = #tpu.core_type<tc>, window_params = [{transform_indices = @transform_0, window_bounds = array<i64: 1, 8, 256>}, {transform_indices = @transform_1, window_bounds = array<i64: 1, 1, 256>}, {transform_indices = @transform_2, window_bounds = array<i64: 1, 1, 256>}, {transform_indices = @transform_3, window_bounds = array<i64: 1, 1, 256>}, {transform_indices = @transform_4, window_bounds = array<i64: 1, 1, 256>}]} {
    %c0_i32 = arith.constant 0 : i32
    %0 = arith.cmpi eq, %arg2, %c0_i32 : i32
    %1 = arith.extui %0 : i1 to i32
    %c0_i32_0 = arith.constant 0 : i32
    %2 = arith.cmpi ne, %1, %c0_i32_0 : i32
    scf.if %2 {
      %cst_27 = arith.constant 0.000000e+00 : f32
      %52 = vector.broadcast %cst_27 : f32 to vector<1x1x256xf32>
      %c0_28 = arith.constant 0 : index
      %c0_29 = arith.constant 0 : index
      %c0_30 = arith.constant 0 : index
      %53 = vector.load %arg6[%c0_28, %c0_29, %c0_30] : memref<1x1x256xf32, #tpu.memory_space<vmem>>, vector<1x1x256xf32>
      tpu.vector_store %arg6[%c0_28, %c0_29, %c0_30], %52 {strides = array<i32>} : memref<1x1x256xf32, #tpu.memory_space<vmem>>, vector<1x1x256xf32>,
      %cst_31 = arith.constant 0.000000e+00 : f32
      %54 = vector.broadcast %cst_31 : f32 to vector<1x1x256xf32>
      %c0_32 = arith.constant 0 : index
      %c0_33 = arith.constant 0 : index
      %c0_34 = arith.constant 0 : index
      %55 = vector.load %arg7[%c0_32, %c0_33, %c0_34] : memref<1x1x256xf32, #tpu.memory_space<vmem>>, vector<1x1x256xf32>
      tpu.vector_store %arg7[%c0_32, %c0_33, %c0_34], %54 {strides = array<i32>} : memref<1x1x256xf32, #tpu.memory_space<vmem>>, vector<1x1x256xf32>,
    } else {
    }
    %c0 = arith.constant 0 : index
    %c0_1 = arith.constant 0 : index
    %c0_2 = arith.constant 0 : index
    %3 = vector.load %arg3[%c0, %c0_1, %c0_2] : memref<1x8x256xf32, #tpu.memory_space<vmem>>, vector<1x8x256xf32>
    %4 = vector.shape_cast %3 : vector<1x8x256xf32> to vector<8x256xf32>
    %c0_3 = arith.constant 0 : index
    %c0_4 = arith.constant 0 : index
    %c0_5 = arith.constant 0 : index
    %5 = vector.load %arg4[%c0_3, %c0_4, %c0_5] : memref<1x1x256xi32, #tpu.memory_space<vmem>>, vector<1x1x256xi32>
    %6 = vector.shape_cast %5 : vector<1x1x256xi32> to vector<1x256xi32>
    %c0_6 = arith.constant 0 : index
    %c0_7 = arith.constant 0 : index
    %c0_8 = arith.constant 0 : index
    %7 = vector.load %arg5[%c0_6, %c0_7, %c0_8] : memref<1x1x256xf32, #tpu.memory_space<vmem>>, vector<1x1x256xf32>
    %8 = vector.shape_cast %7 : vector<1x1x256xf32> to vector<1x256xf32>
    %cst = arith.constant dense<0xFF800000> : vector<256xf32>
    %9 = vector.multi_reduction <maximumf>, %4, %cst [0] : vector<8x256xf32> to vector<256xf32>
    %10 = vector.shape_cast %9 : vector<256xf32> to vector<1x256xf32>
    %11 = vector.broadcast %10 : vector<1x256xf32> to vector<8x256xf32>
    %12 = arith.subf %4, %11 : vector<8x256xf32>
    %13 = math.exp %12 : vector<8x256xf32>
    %cst_9 = arith.constant dense<0.000000e+00> : vector<256xf32>
    %14 = vector.multi_reduction <add>, %13, %cst_9 [0] : vector<8x256xf32> to vector<256xf32>
    %15 = vector.shape_cast %14 : vector<256xf32> to vector<1x256xf32>
    %16 = tpu.iota {dimensions = array<i32: 0>} : vector<8x1xi32>
    %17 = vector.broadcast %16 : vector<8x1xi32> to vector<8x256xi32>
    %18 = vector.broadcast %6 : vector<1x256xi32> to vector<8x256xi32>
    %19 = arith.cmpi eq, %17, %18 : vector<8x256xi32>
    %cst_10 = arith.constant 0.000000e+00 : f32
    %20 = vector.broadcast %cst_10 : f32 to vector<8x256xf32>
    %21 = arith.select %19, %12, %20 : vector<8x256xi1>, vector<8x256xf32>
    %cst_11 = arith.constant dense<0.000000e+00> : vector<256xf32>
    %22 = vector.multi_reduction <add>, %21, %cst_11 [0] : vector<8x256xf32> to vector<256xf32>
    %23 = vector.shape_cast %22 : vector<256xf32> to vector<1x256xf32>
    %c1_i32 = arith.constant 1 : i32
    %24 = arith.muli %arg1, %c1_i32 : i32
    %25 = arith.addi %24, %arg2 : i32
    %26 = tpu.iota {dimensions = array<i32: 1>} : vector<1x256xi32>
    %c256_i32 = arith.constant 256 : i32
    %27 = arith.muli %25, %c256_i32 : i32
    %28 = vector.broadcast %27 : i32 to vector<1x256xi32>
    %29 = arith.addi %28, %26 : vector<1x256xi32>
    %c256_i32_12 = arith.constant 256 : i32
    %30 = vector.broadcast %c256_i32_12 : i32 to vector<1x256xi32>
    %31 = arith.cmpi slt, %29, %30 : vector<1x256xi32>
    %cst_13 = arith.constant 5.000000e-01 : f32
    %32 = vector.broadcast %cst_13 : f32 to vector<1x256xf32>
    %33 = arith.cmpf oge, %8, %32 : vector<1x256xf32>
    %c-100_i32 = arith.constant -100 : i32
    %34 = vector.broadcast %c-100_i32 : i32 to vector<1x256xi32>
    %35 = arith.cmpi ne, %6, %34 : vector<1x256xi32>
    %36 = arith.andi %33, %35 : vector<1x256xi1>
    %37 = arith.andi %36, %31 : vector<1x256xi1>
    %38 = math.log %15 : vector<1x256xf32>
    %39 = arith.subf %38, %23 : vector<1x256xf32>
    %cst_14 = arith.constant 0.000000e+00 : f32
    %40 = vector.broadcast %cst_14 : f32 to vector<1x256xf32>
    %41 = arith.select %37, %39, %40 : vector<1x256xi1>, vector<1x256xf32>
    %c0_15 = arith.constant 0 : index
    %c0_16 = arith.constant 0 : index
    %c0_17 = arith.constant 0 : index
    %42 = vector.load %arg6[%c0_15, %c0_16, %c0_17] : memref<1x1x256xf32, #tpu.memory_space<vmem>>, vector<1x1x256xf32>
    %43 = vector.shape_cast %41 : vector<1x256xf32> to vector<1x1x256xf32>
    %44 = arith.addf %42, %43 : vector<1x1x256xf32>
    %c0_18 = arith.constant 0 : index
    %c0_19 = arith.constant 0 : index
    %c0_20 = arith.constant 0 : index
    %45 = vector.load %arg6[%c0_18, %c0_19, %c0_20] : memref<1x1x256xf32, #tpu.memory_space<vmem>>, vector<1x1x256xf32>
    tpu.vector_store %arg6[%c0_18, %c0_19, %c0_20], %44 {strides = array<i32>} : memref<1x1x256xf32, #tpu.memory_space<vmem>>, vector<1x1x256xf32>,
    %c0_21 = arith.constant 0 : index
    %c0_22 = arith.constant 0 : index
    %c0_23 = arith.constant 0 : index
    %46 = vector.load %arg7[%c0_21, %c0_22, %c0_23] : memref<1x1x256xf32, #tpu.memory_space<vmem>>, vector<1x1x256xf32>
    %47 = arith.extui %37 : vector<1x256xi1> to vector<1x256xi32>
    %48 = arith.sitofp %47 : vector<1x256xi32> to vector<1x256xf32>
    %49 = vector.shape_cast %48 : vector<1x256xf32> to vector<1x1x256xf32>
    %50 = arith.addf %46, %49 : vector<1x1x256xf32>
    %c0_24 = arith.constant 0 : index
    %c0_25 = arith.constant 0 : index
    %c0_26 = arith.constant 0 : index
    %51 = vector.load %arg7[%c0_24, %c0_25, %c0_26] : memref<1x1x256xf32, #tpu.memory_space<vmem>>, vector<1x1x256xf32>
    tpu.vector_store %arg7[%c0_24, %c0_25, %c0_26], %50 {strides = array<i32>} : memref<1x1x256xf32, #tpu.memory_space<vmem>>, vector<1x1x256xf32>,
    return
  }
  func.func @transform_0(%arg0: i32, %arg1: i32, %arg2: i32) -> (i32, i32, i32) {
    %c1_i32 = arith.constant 1 : i32
    %0 = arith.muli %arg1, %c1_i32 : i32
    %1 = arith.addi %0, %arg2 : i32
    %c0_i32 = arith.constant 0 : i32
    %c0_i32_0 = arith.constant 0 : i32
    return %arg0, %c0_i32, %1 : i32, i32, i32
  }
  func.func @transform_1(%arg0: i32, %arg1: i32, %arg2: i32) -> (i32, i32, i32) {
    %c1_i32 = arith.constant 1 : i32
    %0 = arith.muli %arg1, %c1_i32 : i32
    %1 = arith.addi %0, %arg2 : i32
    %c0_i32 = arith.constant 0 : i32
    %c0_i32_0 = arith.constant 0 : i32
    return %arg0, %c0_i32, %1 : i32, i32, i32
  }
  func.func @transform_2(%arg0: i32, %arg1: i32, %arg2: i32) -> (i32, i32, i32) {
    %c1_i32 = arith.constant 1 : i32
    %0 = arith.muli %arg1, %c1_i32 : i32
    %1 = arith.addi %0, %arg2 : i32
    %c0_i32 = arith.constant 0 : i32
    %c0_i32_0 = arith.constant 0 : i32
    return %arg0, %c0_i32, %1 : i32, i32, i32
  }
  func.func @transform_3(%arg0: i32, %arg1: i32, %arg2: i32) -> (i32, i32, i32) {
    %c1_i32 = arith.constant 1 : i32
    %0 = arith.muli %arg0, %c1_i32 : i32
    %1 = arith.addi %0, %arg1 : i32
    %c0_i32 = arith.constant 0 : i32
    %c0_i32_0 = arith.constant 0 : i32
    %c0_i32_1 = arith.constant 0 : i32
    return %1, %c0_i32, %c0_i32_0 : i32, i32, i32
  }
  func.func @transform_4(%arg0: i32, %arg1: i32, %arg2: i32) -> (i32, i32, i32) {
    %c1_i32 = arith.constant 1 : i32
    %0 = arith.muli %arg0, %c1_i32 : i32
    %1 = arith.addi %0, %arg1 : i32
    %c0_i32 = arith.constant 0 : i32
    %c0_i32_0 = arith.constant 0 : i32
    %c0_i32_1 = arith.constant 0 : i32
    return %1, %c0_i32, %c0_i32_0 : i32, i32, i32
  }
}

</mosaic_0001>

<llo_original>
// kernel: tpu_custom_call.1
$region0: #{tpu_custom_call.1}
  #allocation0 [shape = 'u32[]', space=smem, size = 0x4, offset = 0x4, fixed_abs, tag = 'smem constant byte address 0x4 - core index']
  #allocation1 [shape = 'u32[144,128]{1,0:T(1,128)}', space=vmem, size = 0x12000, scoped, tag = 'internal scratch']
  %s0 = inlined_call_operand.hbm [shape: f32[2,8,256], index: 0, kind: input, shape index: {}]
  %s1 = inlined_call_operand.hbm [shape: s32[2,1,256], index: 1, kind: input, shape index: {}]
  %s2 = inlined_call_operand.vmem [shape: f32[2,1,256], index: 2, kind: input, shape index: {}]
  %s3 = inlined_call_operand.hbm [shape: f32[2,1,256], index: 3, kind: output, shape index: {0}]
  %s4 = inlined_call_operand.hbm [shape: f32[2,1,256], index: 4, kind: output, shape index: {1}]
  %5 = xla_tuple %s3, %s4
  %s6 = sld [smem:[#allocation0]]
  $region65: #{tpu_custom_call.1} parent=0
    _
  %s8 = ssub.s32 1, %s6
  %s9 = scalar_select 0, %s8, %s6
  $region1: #{tpu_custom_call.1} parent=0
    #allocation2 [shape = 'u8[16384]{0}', space=vmem, size = 0x4000, scoped, tag = 'input window, operand 0']
    #allocation3 [shape = 's32[2]{0}', space=sflag, size = 0x8, scoped, tag = 'scoped memory for tpu_custom_call.1']
    #allocation4 [shape = 's32[2]{0}', space=sflag, size = 0x8, scoped, tag = 'scoped memory for tpu_custom_call.1']
    #allocation5 [shape = 'u8[2048]{0}', space=vmem, size = 0x800, scoped, tag = 'input window, operand 1']
    #allocation6 [shape = 's32[2]{0}', space=sflag, size = 0x8, scoped, tag = 'scoped memory for tpu_custom_call.1']
    #allocation7 [shape = 'u8[2048]{0}', space=vmem, size = 0x800, scoped, tag = 'output window, operand 0']
    #allocation8 [shape = 'u8[2048]{0}', space=vmem, size = 0x800, scoped, tag = 'output window, operand 1']
    #allocation9 [shape = 's32[2]{0}', space=sflag, size = 0x8, scoped, tag = 'scoped memory for tpu_custom_call.1']
    %10 = vsyncpa [#allocation3], 0
    %s11 = scalar_lea.sflag [#allocation3], 1
    %12 = vsyncpa %s11, 0
    %13 = vsyncpa [#allocation6], 0
    %s14 = scalar_lea.sflag [#allocation6], 1
    %15 = vsyncpa %s14, 0
    %16 = vsyncpa [#allocation4], 0
    %s17 = scalar_lea.sflag [#allocation4], 1
    %18 = vsyncpa %s17, 0
    %19 = vsyncpa [#allocation9], 0
    %s20 = scalar_lea.sflag [#allocation9], 1
    %21 = vsyncpa %s20, 0
    loop: start=0, step=1, limit=4
    $region2: #{tpu_custom_call.1} parent=1 // loop_pre_header
      _
    $region3: #{tpu_custom_call.1} parent=1 // loop_header
      %s23 = sphi 0, %s27
      %p24 = scmp.ge.s32.totalorder %s23, 4
      %s30 = sphi 0, %s49
      %s31 = sphi 0, %s45
      %s32 = sphi 0, %s41
      %s33 = sphi 0, %s30
      %s34 = sphi 0, %s31
      %s35 = sphi 0, %s32
      %s36 = sphi 0, %s33
      %s37 = sphi 0, %s34
      %s38 = sphi 0, %s35
      %s56 = sphi 0, %s58
      %s59 = sphi 0, %s56
      %s60 = sphi 0, %s59
      %s76 = sphi 0, %s60
      %s86 = sphi 0, %s88
      %s89 = sphi 0, %s86
      %s90 = sphi 0, %s89
      %s106 = sphi 0, %s90
      %s116 = sphi 0, %s118
      %s119 = sphi 0, %s116
      %s120 = sphi 0, %s119
      %s136 = sphi 0, %s120
      %s144 = sphi 0, %s146
      %s147 = sphi 0, %s144
      %s148 = sphi 0, %s147
      %s164 = sphi 0, %s148
      %s172 = sphi 0, %s174
      %s175 = sphi 0, %s172
      %s176 = sphi 0, %s175
      %s192 = sphi 0, %s176
    $region4: #{tpu_custom_call.1} parent=1 // loop_header_branch
      %26 = sbr.rel (%p24) target = $region8
    $region5: #{tpu_custom_call.1} parent=1 // loop_body
      %s28 = ssub.s32 %s23, 1
      %s29 = ssub.s32 %s23, 2
      %s39 = sadd.s32 1, %s32
      %p40 = scmp.ge.s32.totalorder %s39, 1
      %s41 = scalar_select %p40, 0, %s39
      %s42 = sadd.s32 1, %s31
      %s43 = scalar_select %p40, %s42, %s31
      %p44 = scmp.ge.s32.totalorder %s43, 1
      %s45 = scalar_select %p44, 0, %s43
      %s46 = sadd.s32 1, %s30
      %s47 = scalar_select %p44, %s46, %s30
      %p48 = scmp.ge.s32.totalorder %s47, 2
      %s49 = scalar_select %p48, 0, %s47
      %s50 = sadd.s32 %s31, %s32
      %s51 = sadd.s32 %s45, %s41
      %s52 = ssub.s32 %s30, %s49
      %s53 = ssub.s32 %s50, %s51
      %s54 = sor.u32 %s52, %s53
      %p55 = scmp.eq.s32.totalorder %s54, 0
      %s57 = sadd.s32 %s56, 1
      %s58 = scalar_select %p55, %s56, %s57
      %p61 = pneg %p55
      %p62 = scmp.eq.s32.totalorder %s23, 1
      %p63 = por %p61, %p62
      %p64 = scmp.ne.s32.totalorder %s56, %s59
      %p65 = scmp.eq.s32.totalorder %s23, 0
      %p66 = por %p64, %p65
      %p67 = scmp.ne.s32.totalorder %s56, %s59
      %p68 = scmp.eq.s32.totalorder %s28, 1
      %p69 = por %p67, %p68
      %p70 = scmp.ne.s32.totalorder %s59, %s60
      %p71 = scmp.eq.s32.totalorder %s28, 0
      %p72 = por %p70, %p71
      %p73 = scmp.ne.s32.totalorder %s59, %s60
      %p74 = scmp.eq.s32.totalorder %s29, 1
      %p75 = por %p73, %p74
      %p77 = scmp.ne.s32.totalorder %s60, %s76
      %p78 = scmp.eq.s32.totalorder %s29, 0
      %p79 = por %p77, %p78
      %s80 = sadd.s32 %s31, %s32
      %s81 = sadd.s32 %s45, %s41
      %s82 = ssub.s32 %s30, %s49
      %s83 = ssub.s32 %s80, %s81
      %s84 = sor.u32 %s82, %s83
      %p85 = scmp.eq.s32.totalorder %s84, 0
      %s87 = sadd.s32 %s86, 1
      %s88 = scalar_select %p85, %s86, %s87
      %p91 = pneg %p85
      %p92 = scmp.eq.s32.totalorder %s23, 1
      %p93 = por %p91, %p92
      %p94 = scmp.ne.s32.totalorder %s86, %s89
      %p95 = scmp.eq.s32.totalorder %s23, 0
      %p96 = por %p94, %p95
      %p97 = scmp.ne.s32.totalorder %s86, %s89
      %p98 = scmp.eq.s32.totalorder %s28, 1
      %p99 = por %p97, %p98
      %p100 = scmp.ne.s32.totalorder %s89, %s90
      %p101 = scmp.eq.s32.totalorder %s28, 0
      %p102 = por %p100, %p101
      %p103 = scmp.ne.s32.totalorder %s89, %s90
      %p104 = scmp.eq.s32.totalorder %s29, 1
      %p105 = por %p103, %p104
      %p107 = scmp.ne.s32.totalorder %s90, %s106
      %p108 = scmp.eq.s32.totalorder %s29, 0
      %p109 = por %p107, %p108
      %s110 = sadd.s32 %s31, %s32
      %s111 = sadd.s32 %s45, %s41
      %s112 = ssub.s32 %s30, %s49
      %s113 = ssub.s32 %s110, %s111
      %s114 = sor.u32 %s112, %s113
      %p115 = scmp.eq.s32.totalorder %s114, 0
      %s117 = sadd.s32 %s116, 1
      %s118 = scalar_select %p115, %s116, %s117
      %p121 = pneg %p115
      %p122 = scmp.eq.s32.totalorder %s23, 1
      %p123 = por %p121, %p122
      %p124 = scmp.ne.s32.totalorder %s116, %s119
      %p125 = scmp.eq.s32.totalorder %s23, 0
      %p126 = por %p124, %p125
      %p127 = scmp.ne.s32.totalorder %s116, %s119
      %p128 = scmp.eq.s32.totalorder %s28, 1
      %p129 = por %p127, %p128
      %p130 = scmp.ne.s32.totalorder %s119, %s120
      %p131 = scmp.eq.s32.totalorder %s28, 0
      %p132 = por %p130, %p131
      %p133 = scmp.ne.s32.totalorder %s119, %s120
      %p134 = scmp.eq.s32.totalorder %s29, 1
      %p135 = por %p133, %p134
      %p137 = scmp.ne.s32.totalorder %s120, %s136
      %p138 = scmp.eq.s32.totalorder %s29, 0
      %p139 = por %p137, %p138
      %s140 = sadd.s32 %s30, %s31
      %s141 = sadd.s32 %s49, %s45
      %s142 = ssub.s32 %s140, %s141
      %p143 = scmp.eq.s32.totalorder %s142, 0
      %s145 = sadd.s32 %s144, 1
      %s146 = scalar_select %p143, %s144, %s145
      %p149 = pneg %p143
      %p150 = scmp.eq.s32.totalorder %s23, 1
      %p151 = por %p149, %p150
      %p152 = scmp.ne.s32.totalorder %s144, %s147
      %p153 = scmp.eq.s32.totalorder %s23, 0
      %p154 = por %p152, %p153
      %p155 = scmp.ne.s32.totalorder %s144, %s147
      %p156 = scmp.eq.s32.totalorder %s28, 1
      %p157 = por %p155, %p156
      %p158 = scmp.ne.s32.totalorder %s147, %s148
      %p159 = scmp.eq.s32.totalorder %s28, 0
      %p160 = por %p158, %p159
      %p161 = scmp.ne.s32.totalorder %s147, %s148
      %p162 = scmp.eq.s32.totalorder %s29, 1
      %p163 = por %p161, %p162
      %p165 = scmp.ne.s32.totalorder %s148, %s164
      %p166 = scmp.eq.s32.totalorder %s29, 0
      %p167 = por %p165, %p166
      %s168 = sadd.s32 %s30, %s31
      %s169 = sadd.s32 %s49, %s45
      %s170 = ssub.s32 %s168, %s169
      %p171 = scmp.eq.s32.totalorder %s170, 0
      %s173 = sadd.s32 %s172, 1
      %s174 = scalar_select %p171, %s172, %s173
      %p177 = pneg %p171
      %p178 = scmp.eq.s32.totalorder %s23, 1
      %p179 = por %p177, %p178
      %p180 = scmp.ne.s32.totalorder %s172, %s175
      %p181 = scmp.eq.s32.totalorder %s23, 0
      %p182 = por %p180, %p181
      %p183 = scmp.ne.s32.totalorder %s172, %s175
      %p184 = scmp.eq.s32.totalorder %s28, 1
      %p185 = por %p183, %p184
      %p186 = scmp.ne.s32.totalorder %s175, %s176
      %p187 = scmp.eq.s32.totalorder %s28, 0
      %p188 = por %p186, %p187
      %p189 = scmp.ne.s32.totalorder %s175, %s176
      %p190 = scmp.eq.s32.totalorder %s29, 1
      %p191 = por %p189, %p190
      %p193 = scmp.ne.s32.totalorder %s176, %s192
      %p194 = scmp.eq.s32.totalorder %s29, 0
      %p195 = por %p193, %p194
      %p196 = scmp.le.s32.totalorder 1, %s23
      %p197 = scmp.lt.s32.totalorder %s23, 3
      %p198 = pnand %p196, %p197
      %p199 = pneg %p198
      // Predicated region
      $region9: #{tpu_custom_call.1} parent=5 // pred_check
        _
      $region10: #{tpu_custom_call.1} parent=5 // pred_check_branch
        %201 = sbr.rel (%p198) target = $region12
      $region11: #{tpu_custom_call.1} parent=5 // pred_region
        %s202 = ssub.s32 %s23, 1
      $region12: #{tpu_custom_call.1} parent=5 // pred_fallthru
        _
      %p203 = scmp.lt.s32.totalorder %s23, 2
      // Predicated region
      $region13: #{tpu_custom_call.1} parent=5 // pred_check
        %p204 = pneg %p203
      $region14: #{tpu_custom_call.1} parent=5 // pred_check_branch
        %206 = sbr.rel (%p204) target = $region16
      $region15: #{tpu_custom_call.1} parent=5 // pred_region
        // Predicated region
        $region17: #{tpu_custom_call.1} parent=15 // pred_check
          %p207 = pneg %p66
        $region18: #{tpu_custom_call.1} parent=15 // pred_check_branch
          %209 = sbr.rel (%p207) target = $region20
        $region19: #{tpu_custom_call.1} parent=15 // pred_region
          %s210 = sand.u32 %s56, 1
          %s211 = scalar_lea.sflag [#allocation3], %s210
          %s212 = sand.u32 %s56, 1
          %s213 = smul.addr %s212, 16
          %s214 = scalar_lea.vmem [#allocation2], %s213
          %s215 = sadd.s32 %s31, %s32
          %s216 = smul.u32 2, %s215
          %s218 = ssub.s32 256, 256
          %219 = vsyncadd %s211, %s218
          %s220 = smul.addr %s30, 2
          %s221 = sadd.s32 %s216, %s220
          %s222 = smul.addr %s221, 128
          %s223 = scalar_lea.hbm %s0, %s222
          %s225 = sshll.u32 %s214, 4
          %s226 = int_to_ptr.vmem [resolvable:$true] %s225
          %228 = dma.hbm_to_vmem [thread:$0]  %s223, 256, %s226, %s211
        $region20: #{tpu_custom_call.1} parent=15 // pred_fallthru
          _
        // Predicated region
        $region21: #{tpu_custom_call.1} parent=15 // pred_check
          %p229 = pneg %p96
        $region22: #{tpu_custom_call.1} parent=15 // pred_check_branch
          %231 = sbr.rel (%p229) target = $region24
        $region23: #{tpu_custom_call.1} parent=15 // pred_region
          %s232 = sand.u32 %s86, 1
          %s233 = scalar_lea.sflag [#allocation6], %s232
          %s234 = sand.u32 %s86, 1
          %s235 = smul.addr %s234, 2
          %s236 = scalar_lea.vmem [#allocation5], %s235
          %s237 = sadd.s32 %s31, %s32
          %s238 = smul.u32 2, %s237
          %s240 = ssub.s32 32, 32
          %241 = vsyncadd %s233, %s240
          %s242 = smul.addr %s30, 2
          %s243 = sadd.s32 %s238, %s242
          %s244 = smul.addr %s243, 16
          %s245 = scalar_lea.hbm %s1, %s244
          %s247 = sshll.u32 %s236, 4
          %s248 = int_to_ptr.vmem [resolvable:$true] %s247
          %250 = dma.hbm_to_vmem [thread:$0]  %s245, 32, %s248, %s233
        $region24: #{tpu_custom_call.1} parent=15 // pred_fallthru
          _
        // Predicated region
        $region25: #{tpu_custom_call.1} parent=15 // pred_check
          %p251 = pneg %p126
        $region26: #{tpu_custom_call.1} parent=15 // pred_check_branch
          %253 = sbr.rel (%p251) target = $region28
        $region27: #{tpu_custom_call.1} parent=15 // pred_region
          %s254 = sadd.s32 %s31, %s32
          %s255 = smul.u32 2, %s254
          %p256 = scmp.lt.s32.totalorder %s30, 1
          %s257 = scalar_select %p256, %s30, 1
          %p258 = scmp.lt.s32.totalorder %s255, 1
          %s259 = scalar_select %p258, %s255, 1
          %s260 = smul.addr %s257, 2
          %s261 = sadd.s32 %s259, %s260
          %s262 = scalar_lea.vmem %s2, %s261
          %s263 = sadd.s32 %s31, %s32
          %s264 = smul.u32 2, %s263
        $region28: #{tpu_custom_call.1} parent=15 // pred_fallthru
          _
      $region16: #{tpu_custom_call.1} parent=5 // pred_fallthru
        _
      %p265 = scmp.le.s32.totalorder 1, %s23
      %p266 = scmp.lt.s32.totalorder %s23, 3
      %p267 = pnand %p265, %p266
      %p268 = pneg %p267
      // Predicated region
      $region29: #{tpu_custom_call.1} parent=5 // pred_check
        _
      $region30: #{tpu_custom_call.1} parent=5 // pred_check_branch
        %270 = sbr.rel (%p267) target = $region32
      $region31: #{tpu_custom_call.1} parent=5 // pred_region
        %s271 = ssub.s32 %s23, 1
        %s272 = sand.u32 %s59, 1
        %s273 = scalar_lea.sflag [#allocation3], %s272
        %s274 = sand.u32 %s59, 1
        %s275 = smul.addr %s274, 16
        %s276 = scalar_lea.vmem [#allocation2], %s275
        // Predicated region
        $region33: #{tpu_custom_call.1} parent=31 // pred_check
          %p277 = pneg %p72
        $region34: #{tpu_custom_call.1} parent=31 // pred_check_branch
          %279 = sbr.rel (%p277) target = $region36
        $region35: #{tpu_custom_call.1} parent=31 // pred_region
          %280 = dma.done %s273, 256
        $region36: #{tpu_custom_call.1} parent=31 // pred_fallthru
          _
        %s281 = sand.u32 %s89, 1
        %s282 = scalar_lea.sflag [#allocation6], %s281
        %s283 = sand.u32 %s89, 1
        %s284 = smul.addr %s283, 2
        %s285 = scalar_lea.vmem [#allocation5], %s284
        // Predicated region
        $region37: #{tpu_custom_call.1} parent=31 // pred_check
          %p286 = pneg %p102
        $region38: #{tpu_custom_call.1} parent=31 // pred_check_branch
          %288 = sbr.rel (%p286) target = $region40
        $region39: #{tpu_custom_call.1} parent=31 // pred_region
          %289 = dma.done %s282, 32
        $region40: #{tpu_custom_call.1} parent=31 // pred_fallthru
          _
        %s290 = sand.u32 %s59, 1
        %s291 = scalar_lea.sflag [#allocation3], %s290
        %s292 = sand.u32 %s59, 1
        %s293 = smul.addr %s292, 16
        %s294 = scalar_lea.vmem [#allocation2], %s293
        %p295 = pneg %p72
        %p296 = pneg %p69
        %s297 = sand.u32 %s89, 1
        %s298 = scalar_lea.sflag [#allocation6], %s297
        %s299 = sand.u32 %s89, 1
        %s300 = smul.addr %s299, 2
        %s301 = scalar_lea.vmem [#allocation5], %s300
        %p302 = pneg %p102
        %p303 = pneg %p99
        %s304 = sadd.s32 %s34, %s35
        %s305 = smul.u32 2, %s304
        %p306 = scmp.lt.s32.totalorder %s33, 1
        %s307 = scalar_select %p306, %s33, 1
        %p308 = scmp.lt.s32.totalorder %s305, 1
        %s309 = scalar_select %p308, %s305, 1
        %s310 = smul.addr %s307, 2
        %s311 = sadd.s32 %s309, %s310
        %s312 = scalar_lea.vmem %s2, %s311
        %p313 = pneg %p132
        %p314 = pneg %p129
        %p315 = pneg %p160
        %p316 = pneg %p157
        %s317 = sand.u32 %s147, 1
        %s318 = scalar_lea.sflag [#allocation4], %s317
        %s319 = sand.u32 %s147, 1
        %s320 = smul.addr %s319, 2
        %s321 = scalar_lea.vmem [#allocation7], %s320
        %p322 = pneg %p188
        %p323 = pneg %p185
        %s324 = sand.u32 %s175, 1
        %s325 = scalar_lea.sflag [#allocation9], %s324
        %s326 = sand.u32 %s175, 1
        %s327 = smul.addr %s326, 2
        %s328 = scalar_lea.vmem [#allocation8], %s327
        %s329 = sadd.s32 %s34, %s35
        %s330 = smul.u32 2, %s329
        %s331 = sadd.s32 %s34, %s35
        %s332 = smul.u32 2, %s331
        %s333 = sadd.s32 %s34, %s35
        %s334 = smul.u32 2, %s333
        %p335 = scmp.lt.s32.totalorder %s33, 1
        %s336 = scalar_select %p335, %s33, 1
        %p337 = scmp.lt.s32.totalorder %s334, 1
        %s338 = scalar_select %p337, %s334, 1
        %s339 = smul.addr %s336, 2
        %s340 = sadd.s32 %s338, %s339
        %s341 = scalar_lea.vmem %s2, %s340
        %s342 = sadd.s32 %s34, %s35
        %s343 = smul.u32 2, %s342
        %s344 = sadd.s32 %s33, %s34
        %s345 = sadd.s32 %s33, %s34
        %p346 = scmp.eq.s32.totalorder %s35, 0
        // Predicated region
        $region41: #{tpu_custom_call.1} parent=31 // pred_check
          %p347 = pneg %p346
        $region42: #{tpu_custom_call.1} parent=31 // pred_check_branch
          %349 = sbr.rel (%p347) target = $region44
        $region43: #{tpu_custom_call.1} parent=31 // pred_region
          %v350 = vlaneseq
          %vm351 = vcmp.ge.s32.totalorder %v350, 0
          %vm352 = vcmp.lt.s32.totalorder %v350, 256
          %vm353 = vmand %vm351, %vm352
          %354 = vst.msk [vmem:[%s321] sm:$0x3] %vm353, 0.0
          %355 = vst.msk [vmem:[%s328] sm:$0x3] %vm353, 0.0
        $region44: #{tpu_custom_call.1} parent=31 // pred_fallthru
          _
        %v356 = vld [vmem:[%s276] sm:$0xff]
        %v357 = vld [vmem:[%s276 + $0x8] sm:$0xff]
        %v358 = vld [vmem:[%s285] sm:$0x3]
        %v359 = vld [vmem:[%s341] sm:$0x3]
        %v360 = vrot.slane %v356, 4
        %v361 = vmax.f32 %v356, %v360
        %v362 = vrot.slane %v361, 2
        %v363 = vmax.f32 %v361, %v362
        %v364 = vrot.slane %v363, 1
        %v365 = vmax.f32 %v363, %v364
        %v366 = vrot.slane %v357, 4
        %v367 = vmax.f32 %v357, %v366
        %v368 = vrot.slane %v367, 2
        %v369 = vmax.f32 %v367, %v368
        %v370 = vrot.slane %v369, 1
        %v371 = vmax.f32 %v369, %v370
        %v372 = vsub.f32 %v356, %v365
        %v373 = vsub.f32 %v357, %v371
        %v374 = vmul.f32 %v372, 1.442695
        %v375 = vpow.pop %v374
        %v376 = vmul.f32 %v373, 1.442695
        %v377 = vpow.pop %v376
        %v378 = vrot.slane %v375, 4
        %v379 = vadd.f32 %v375, %v378
        %v380 = vrot.slane %v379, 2
        %v381 = vadd.f32 %v379, %v380
        %v382 = vrot.slane %v381, 1
        %v383 = vadd.f32 %v381, %v382
        %v384 = vrot.slane %v377, 4
        %v385 = vadd.f32 %v377, %v384
        %v386 = vrot.slane %v385, 2
        %v387 = vadd.f32 %v385, %v386
        %v388 = vrot.slane %v387, 1
        %v389 = vadd.f32 %v387, %v388
        %v390 = vlaneseq
        %v391 = vshrl.u32 %v390, 7
        %v392 = vlaneseq
        %v393 = vshrl.u32 %v392, 7
        %v394 = vsub.s32 0, %v393
        %v395 = vrot.slane %v358, %v394
        %v396 = vlaneseq
        %v397 = vshrl.u32 %v396, 7
        %v398 = vsub.s32 1, %v397
        %v399 = vrot.slane %v358, %v398
        %vm400 = vcmp.eq.s32.totalorder %v391, %v395
        %vm401 = vcmp.eq.s32.totalorder %v391, %v399
        %v402 = vsel %vm400, %v372, 0.0
        %v403 = vsel %vm401, %v373, 0.0
        %v404 = vrot.slane %v402, 4
        %v405 = vadd.f32 %v402, %v404
        %v406 = vrot.slane %v405, 2
        %v407 = vadd.f32 %v405, %v406
        %v408 = vrot.slane %v407, 1
        %v409 = vadd.f32 %v407, %v408
        %v410 = vrot.slane %v403, 4
        %v411 = vadd.f32 %v403, %v410
        %v412 = vrot.slane %v411, 2
        %v413 = vadd.f32 %v411, %v412
        %v414 = vrot.slane %v413, 1
        %v415 = vadd.f32 %v413, %v414
        %s416 = sadd.s32 %s34, %s35
        %v417 = vlaneseq
        %v418 = vand.u32 %v417, 127
        %v419 = vadd.s32 %v418, 128
        %s420 = smul.u32 %s416, 256
        %v421 = vstv %s420
        %v422 = vadd.s32 %v421, %v418
        %v423 = vadd.s32 %v421, %v419
        %vm424 = vcmp.lt.s32.totalorder %v422, 256
        %vm425 = vcmp.lt.s32.totalorder %v423, 256
        %vm426 = vcmp.ge.f32.partialorder %v359, 0.5
        %vm427 = vcmp.ne.s32.totalorder %v358, 4294967196
        %vm428 = vmand %vm426, %vm427
        %v429 = vsel %vm424, 1, 0
        %v430 = vsel %vm425, 1, 0
        %v431 = vcombine.low %v429, %v430
        %v433 = vunpack.c.l.s4 1966171168
        %v434 = vunpack.c.0.s8 %v433
        %v435 = vlaneseq
        %v436 = vshrl.u32 %v435, 7
        %v437 = vsub.s32 %v434, %v436
        %v438 = vrot.slane %v431, %v437
        %v440 = vunpack.c.l.s4 1966171168
        %v441 = vunpack.c.0.s8 %v440
        %v442 = vlaneseq
        %v443 = vshrl.u32 %v442, 7
        %v444 = vsub.s32 %v441, %v443
        %v445 = vrot.slane %v438, %v444
        %vm446 = vcmp.ne.s32.totalorder %v445, 0
        %vm447 = vmand %vm428, %vm446
        %v448 = vlog2.pop %v383
        %v449 = vmul.f32 %v448, 0.6931472
        %v450 = vlog2.pop %v389
        %v451 = vmul.f32 %v450, 0.6931472
        %v452 = vsub.f32 %v449, %v409
        %v453 = vsub.f32 %v451, %v415
        %v456 = vcombine.low %v452, %v453
        %v458 = vunpack.c.l.s4 1966171168
        %v459 = vunpack.c.0.s8 %v458
        %v460 = vlaneseq
        %v461 = vshrl.u32 %v460, 7
        %v462 = vsub.s32 %v459, %v461
        %v463 = vrot.slane %v456, %v462
        %v465 = vunpack.c.l.s4 1966171168
        %v466 = vunpack.c.0.s8 %v465
        %v467 = vlaneseq
        %v468 = vshrl.u32 %v467, 7
        %v469 = vsub.s32 %v466, %v468
        %v470 = vrot.slane %v463, %v469
        %v472 = vsel %vm447, %v470, 0.0
        %v473 = vld [vmem:[%s321] sm:$0x3]
        %v474 = vadd.f32 %v473, %v472
        %v475 = vlaneseq
        %vm476 = vcmp.ge.s32.totalorder %v475, 0
        %vm477 = vcmp.lt.s32.totalorder %v475, 256
        %vm478 = vmand %vm476, %vm477
        %479 = vst.msk [vmem:[%s321] sm:$0x3] %vm478, %v474
        %v480 = vld [vmem:[%s328] sm:$0x3]
        %v481 = vsel %vm447, 1, 0
        %v482 = vcvt.s32.f32 %v481
        %v483 = vadd.f32 %v480, %v482
        %484 = vst.msk [vmem:[%s328] sm:$0x3] %vm478, %v483
        %s485 = sand.u32 %s147, 1
        %s486 = scalar_lea.sflag [#allocation4], %s485
        %s487 = sand.u32 %s147, 1
        %s488 = smul.addr %s487, 2
        %s489 = scalar_lea.vmem [#allocation7], %s488
        %s490 = sand.u32 %s175, 1
        %s491 = scalar_lea.sflag [#allocation9], %s490
        %s492 = sand.u32 %s175, 1
        %s493 = smul.addr %s492, 2
        %s494 = scalar_lea.vmem [#allocation8], %s493
        // Predicated region
        $region45: #{tpu_custom_call.1} parent=31 // pred_check
          %p495 = pneg %p157
        $region46: #{tpu_custom_call.1} parent=31 // pred_check_branch
          %497 = sbr.rel (%p495) target = $region48
        $region47: #{tpu_custom_call.1} parent=31 // pred_region
          %s498 = sadd.s32 %s33, %s34
          %s500 = ssub.s32 32, 32
          %501 = vsyncadd %s486, %s500
          %s502 = smul.addr %s498, 2
          %s503 = smul.addr %s502, 16
          %s504 = scalar_lea.hbm %s3, %s503
          %s506 = sshll.u32 %s489, 4
          %s507 = int_to_ptr.vmem [resolvable:$true] %s506
          %509 = dma.vmem_to_hbm [thread:$0]  %s507, 32, %s504, %s486
        $region48: #{tpu_custom_call.1} parent=31 // pred_fallthru
          _
        // Predicated region
        $region49: #{tpu_custom_call.1} parent=31 // pred_check
          %p510 = pneg %p185
        $region50: #{tpu_custom_call.1} parent=31 // pred_check_branch
          %512 = sbr.rel (%p510) target = $region52
        $region51: #{tpu_custom_call.1} parent=31 // pred_region
          %s513 = sadd.s32 %s33, %s34
          %s515 = ssub.s32 32, 32
          %516 = vsyncadd %s491, %s515
          %s517 = smul.addr %s513, 2
          %s518 = smul.addr %s517, 16
          %s519 = scalar_lea.hbm %s4, %s518
          %s521 = sshll.u32 %s494, 4
          %s522 = int_to_ptr.vmem [resolvable:$true] %s521
          %524 = dma.vmem_to_hbm [thread:$0]  %s522, 32, %s519, %s491
        $region52: #{tpu_custom_call.1} parent=31 // pred_fallthru
          _
      $region32: #{tpu_custom_call.1} parent=5 // pred_fallthru
        _
      %p525 = scmp.le.s32.totalorder 2, %s23
      // Predicated region
      $region53: #{tpu_custom_call.1} parent=5 // pred_check
        %p526 = pneg %p525
      $region54: #{tpu_custom_call.1} parent=5 // pred_check_branch
        %528 = sbr.rel (%p526) target = $region56
      $region55: #{tpu_custom_call.1} parent=5 // pred_region
        %s529 = ssub.s32 %s23, 2
        // Predicated region
        $region57: #{tpu_custom_call.1} parent=55 // pred_check
          %p530 = pneg %p163
        $region58: #{tpu_custom_call.1} parent=55 // pred_check_branch
          %532 = sbr.rel (%p530) target = $region60
        $region59: #{tpu_custom_call.1} parent=55 // pred_region
          %s533 = sand.u32 %s148, 1
          %s534 = scalar_lea.sflag [#allocation4], %s533
          %s535 = sand.u32 %s148, 1
          %s536 = smul.addr %s535, 2
          %s537 = scalar_lea.vmem [#allocation7], %s536
          %538 = dma.done %s534, 32
        $region60: #{tpu_custom_call.1} parent=55 // pred_fallthru
          _
        // Predicated region
        $region61: #{tpu_custom_call.1} parent=55 // pred_check
          %p539 = pneg %p191
        $region62: #{tpu_custom_call.1} parent=55 // pred_check_branch
          %541 = sbr.rel (%p539) target = $region64
        $region63: #{tpu_custom_call.1} parent=55 // pred_region
          %s542 = sand.u32 %s176, 1
          %s543 = scalar_lea.sflag [#allocation9], %s542
          %s544 = sand.u32 %s176, 1
          %s545 = smul.addr %s544, 2
          %s546 = scalar_lea.vmem [#allocation8], %s545
          %547 = dma.done %s543, 32
        $region64: #{tpu_custom_call.1} parent=55 // pred_fallthru
          _
      $region56: #{tpu_custom_call.1} parent=5 // pred_fallthru
        _
    $region6: #{tpu_custom_call.1} parent=1 // loop_footer
      %s27 = sadd.s32 1, %s23
    $region7: #{tpu_custom_call.1} parent=1 // loop_footer_branch
      %22 = sbr.rel target = $region3
    $region8: #{tpu_custom_call.1} parent=1 // loop_exit
      _
    %548 = vsyncpa [#allocation3], 1
    %s549 = scalar_lea.sflag [#allocation3], 1
    %550 = vsyncpa %s549, 1
    %551 = vsyncpa [#allocation6], 1
    %s552 = scalar_lea.sflag [#allocation6], 1
    %553 = vsyncpa %s552, 1
    %554 = vsyncpa [#allocation4], 1
    %s555 = scalar_lea.sflag [#allocation4], 1
    %556 = vsyncpa %s555, 1
    %557 = vsyncpa [#allocation9], 1
    %s558 = scalar_lea.sflag [#allocation9], 1
    %559 = vsyncpa %s558, 1

</llo_original>
